<compile_context>
chip_gen: v6e
topology: v6e:2x2x1
jax: 0.10.0
libtpu: 0.0.40
codegen_flags: <defaults>
</compile_context>

<pallas_src>
import jax
import jax.numpy as jnp
from jax.experimental import pallas as pl
from jax.experimental.pallas import tpu as pltpu


# --------------------------------------------------------------------------- #
# Kernel
# --------------------------------------------------------------------------- #
def _mlp_kernel(x_ref, wfc_ref, bfc_ref, wproj_ref, bproj_ref, o_ref, acc_ref):
    """One (seq_tile, inter_tile) grid cell.

    Grid axis 1 is the reduction over the intermediate dimension; acc_ref is a
    (tm, H) f32 accumulator resident across that axis (init at k==0, bias add +
    cast + store at k==last).
    """
    k = pl.program_id(1)

    @pl.when(k == 0)
    def _init():
        acc_ref[...] = jnp.zeros_like(acc_ref)

    # First matmul: (tm, H) @ (H, ti) -> (tm, ti).  Operands in native (bf16)
    # dtype at full MXU rate, f32 accumulation.
    h = jnp.dot(x_ref[...], wfc_ref[...], preferred_element_type=jnp.float32)
    h = h + bfc_ref[...].astype(jnp.float32)

    # gelu (tanh approximation) in f32; tanh goes to the EUP slot.
    c = 0.7978845608028654  # sqrt(2 / pi)
    h = 0.5 * h * (1.0 + jnp.tanh(c * (h + 0.044715 * (h * (h * h)))))

    # Second matmul partial product: (tm, ti) @ (ti, H) accumulated in f32.
    acc_ref[...] += jnp.dot(h.astype(wproj_ref.dtype), wproj_ref[...],
                            preferred_element_type=jnp.float32)

    @pl.when(k == pl.num_programs(1) - 1)
    def _finalize():
        o_ref[...] = (acc_ref[...]
                      + bproj_ref[...].astype(jnp.float32)).astype(o_ref.dtype)


# --------------------------------------------------------------------------- #
# Tile / VMEM sizing helpers
# --------------------------------------------------------------------------- #
def _round_up(x, m):
    return ((x + m - 1) // m) * m


def _buffers_bytes(tm, ti, H, x_bytes, w_bytes, out_bytes):
    """Honest VMEM consumption model for one grid cell."""
    return (2 * tm * H * x_bytes          # x tile (double-buffered)
            + 2 * tm * H * out_bytes      # out tile (double-buffered)
            + 2 * H * ti * w_bytes        # W_fc tile (double-buffered)
            + 2 * ti * H * w_bytes        # W_proj tile (double-buffered)
            + 2 * (ti + H) * w_bytes      # bias tiles
            + tm * H * 4                  # f32 accumulator scratch
            + tm * ti * (4 + w_bytes))    # gelu f32 temporary + cast copy


def _choose_tiles(S, H, I, x_bytes, w_bytes, out_bytes, vmem_cap,
                  seq_tile, inter_tile):
    # Intermediate tile: largest lane-aligned divisor of I, capped at 2048
    # (larger ti does not cut HBM weight traffic; freed VMEM goes to tm).
    if inter_tile is not None:
        ti = inter_tile
    else:
        ti = None
        for t in (2048, 1024, 512, 256, 128):
            if I % t == 0:
                ti = t
                break
        if ti is None:
            ti = I  # tiny / ragged intermediate: single block

    # Usable VMEM budget: leave headroom for Mosaic internal scratch.
    budget = (vmem_cap * 7) // 8 - (12 << 20)
    budget = max(budget, 24 << 20)

    if seq_tile is not None:
        tm = seq_tile
    else:
        tm = 128
        for t in (1024, 512, 256, 128):
            if _buffers_bytes(t, ti, H, x_bytes, w_bytes, out_bytes) <= budget:
                tm = t
                break
        if S <= tm:
            # Short / decode sequence: single block covering the (8-aligned)
            # padded sequence — avoids huge zero padding.
            tm = max(8, _round_up(S, 8))
        else:
            # Keep >= 2 steps on the parallel seq axis (v7x megacore) when it
            # does not cost padding.
            while tm > 128 and _round_up(S, tm) // tm < 2:
                tm //= 2

    return tm, ti


# --------------------------------------------------------------------------- #
# Wrapper
# --------------------------------------------------------------------------- #
def mlp_pallas(x, w_fc, b_fc, w_proj, b_proj, *,
               seq_tile=None, inter_tile=None,
               compute_dtype=None, weight_buffers=2):
    """x: (S, H); w_fc: (H, I); b_fc: (I,); w_proj: (I, H); b_proj: (H,)."""
    S, H = x.shape
    Hf, I = w_fc.shape
    assert Hf == H and w_proj.shape == (I, H)
    assert b_fc.shape == (I,) and b_proj.shape == (H,)

    out_dtype = x.dtype

    # bf16 operands by default when inputs arrive as f32 (full MXU rate, half
    # the HBM/VMEM bytes).  Accumulation stays f32; output cast back.
    if compute_dtype is None:
        compute_dtype = jnp.bfloat16 if x.dtype == jnp.float32 else x.dtype
    x_c = x.astype(compute_dtype)
    w_fc_c = w_fc.astype(compute_dtype)
    w_proj_c = w_proj.astype(compute_dtype)
    # Biases stay in their native (f32) precision — they are added to the f32
    # accumulator / intermediate anyway and are tiny.
    b_fc2 = b_fc.reshape(1, I)
    b_proj2 = b_proj.reshape(1, H)

    try:
        vmem_cap = pltpu.get_tpu_info().vmem_capacity_bytes
    except Exception:
        vmem_cap = 64 * 1024 * 1024  # conservative (v7x per-TC VMEM)

    x_bytes = jnp.dtype(compute_dtype).itemsize
    w_bytes = jnp.dtype(compute_dtype).itemsize
    out_bytes = jnp.dtype(out_dtype).itemsize
    bias_bytes = jnp.dtype(b_fc.dtype).itemsize

    tm, ti = _choose_tiles(S, H, I, x_bytes, w_bytes, out_bytes, vmem_cap,
                           seq_tile, inter_tile)
    assert I % ti == 0, f"intermediate {I} not divisible by inter_tile {ti}"
    assert tm % 8 == 0 or tm == S, f"seq tile {tm} must be a multiple of 8"

    # Pad the sequence to a multiple of tm (output is sliced back).
    S_pad = _round_up(S, tm)
    if S_pad != S:
        x_c = jnp.pad(x_c, ((0, S_pad - S), (0, 0)))

    grid = (S_pad // tm, I // ti)

    # Honest VMEM limit: modeled buffers + slack + Mosaic internal scratch.
    needed = _buffers_bytes(tm, ti, H, x_bytes, w_bytes, out_bytes)
    needed += 2 * (ti + H) * bias_bytes
    vmem_limit = needed + needed // 4 + (8 << 20)
    vmem_limit = int(min(max(vmem_limit, 32 << 20), (vmem_cap * 7) // 8))

    # Advisory cost estimate for XLA's scheduler (weights re-read per seq tile).
    cost = pl.CostEstimate(
        flops=4 * S_pad * H * I,
        transcendentals=S_pad * I,
        bytes_accessed=(grid[0] * 2 * H * I * w_bytes
                        + S_pad * H * (x_bytes + out_bytes)
                        + (I + H) * bias_bytes),
    )

    def _weight_spec(shape, imap):
        # Optional deeper weight buffering (e.g. 3 on v5e where 128 MiB VMEM
        # has room and DMA jitter can be exposed).  Default 2 = standard
        # double-buffering.
        if weight_buffers and weight_buffers > 2 and hasattr(pl, "Buffered"):
            return pl.BlockSpec(shape, imap,
                                pipeline_mode=pl.Buffered(weight_buffers))
        return pl.BlockSpec(shape, imap)

    out = pl.pallas_call(
        _mlp_kernel,
        out_shape=jax.ShapeDtypeStruct((S_pad, H), out_dtype),
        grid_spec=pltpu.PrefetchScalarGridSpec(
            num_scalar_prefetch=0,
            grid=grid,
            in_specs=[
                pl.BlockSpec((tm, H), lambda i, k: (i, 0)),      # x tile (resident over k)
                _weight_spec((H, ti), lambda i, k: (0, k)),      # W_fc column tile
                pl.BlockSpec((1, ti), lambda i, k: (0, k)),      # b_fc tile
                _weight_spec((ti, H), lambda i, k: (k, 0)),      # W_proj row tile
                pl.BlockSpec((1, H), lambda i, k: (0, 0)),       # b_proj (constant, tiny)
            ],
            out_specs=pl.BlockSpec((tm, H), lambda i, k: (i, 0)),
            scratch_shapes=[pltpu.VMEM((tm, H), jnp.float32)],
        ),
        compiler_params=pltpu.CompilerParams(
            dimension_semantics=("parallel", "arbitrary"),
            vmem_limit_bytes=vmem_limit,
        ),
        cost_estimate=cost,
    )(x_c, w_fc_c, b_fc2, w_proj_c, b_proj2)

    if S_pad != S:
        out = out[:S]
    return out


# --------------------------------------------------------------------------- #
# References
# --------------------------------------------------------------------------- #
def mlp_reference(x, w_fc, b_fc, w_proj, b_proj):
    h = x @ w_fc + b_fc
    h = jax.nn.gelu(h, approximate=True)  # tanh approximation
    return h @ w_proj + b_proj


def mlp_reference_bf16(x, w_fc, b_fc, w_proj, b_proj):
    """Mirrors the kernel's bf16-operand / f32-accumulate numerics."""
    f32, bf = jnp.float32, jnp.bfloat16
    xb = x.astype(bf).astype(f32)
    wf = w_fc.astype(bf).astype(f32)
    wp = w_proj.astype(bf).astype(f32)
    h = xb @ wf + b_fc.astype(f32)
    h = jax.nn.gelu(h, approximate=True)
    h = h.astype(bf).astype(f32)
    return h @ wp + b_proj.astype(f32)


if __name__ == "__main__":
    key = jax.random.PRNGKey(0)

    # Test 1: toy module shapes (seq=8, hidden=32, intermediate=4*hidden),
    # f32 compute path -> tight tolerance.
    S, H = 8, 32
    I = 4 * H
    k1, k2, k3, k4, k5, k6 = jax.random.split(key, 6)
    x = jax.random.normal(k1, (S, H), dtype=jnp.float32)
    w_fc = jax.random.normal(k2, (H, I), dtype=jnp.float32) * 0.02
    b_fc = jax.random.normal(k3, (I,), dtype=jnp.float32) * 0.02
    w_proj = jax.random.normal(k4, (I, H), dtype=jnp.float32) * 0.02
    b_proj = jax.random.normal(k5, (H,), dtype=jnp.float32) * 0.02

    out = jax.block_until_ready(
        mlp_pallas(x, w_fc, b_fc, w_proj, b_proj, compute_dtype=jnp.float32))
    ref = mlp_reference(x, w_fc, b_fc, w_proj, b_proj)
    assert out.shape == (S, H)
    assert jnp.allclose(out, ref, atol=1e-5, rtol=1e-5), "mismatch vs reference (test 1)"

    # Test 2: ragged sequence (padding), multi-tile seq axis, intermediate-dim
    # reduction, default bf16 operand path.  grid = (2, 4).
    S2, H2, I2 = 200, 128, 512
    k1, k2, k3, k4, k5 = jax.random.split(k6, 5)
    x2 = jax.random.normal(k1, (S2, H2), dtype=jnp.float32)
    w_fc2 = jax.random.normal(k2, (H2, I2), dtype=jnp.float32) * 0.02
    b_fc2 = jax.random.normal(k3, (I2,), dtype=jnp.float32) * 0.02
    w_proj2 = jax.random.normal(k4, (I2, H2), dtype=jnp.float32) * 0.02
    b_proj2 = jax.random.normal(k5, (H2,), dtype=jnp.float32) * 0.02

    out2 = jax.block_until_ready(
        mlp_pallas(x2, w_fc2, b_fc2, w_proj2, b_proj2,
                   seq_tile=128, inter_tile=128))
    ref2 = mlp_reference_bf16(x2, w_fc2, b_fc2, w_proj2, b_proj2)
    assert out2.shape == (S2, H2)
    assert jnp.allclose(out2, ref2, atol=5e-3, rtol=5e-2), "mismatch vs reference (test 2)"

    print("KERNEL_OK")
</pallas_src>

<mosaic_0001>
module attributes {stable_mosaic.version = 11 : i64} {
  func.func @_mlp_kernel(%arg0: i32, %arg1: i32, %arg2: memref<8x32xf32, #tpu.memory_space<vmem>>, %arg3: memref<32x128xf32, #tpu.memory_space<vmem>>, %arg4: memref<1x128xf32, #tpu.memory_space<vmem>>, %arg5: memref<128x32xf32, #tpu.memory_space<vmem>>, %arg6: memref<1x32xf32, #tpu.memory_space<vmem>>, %arg7: memref<8x32xf32, #tpu.memory_space<vmem>>, %arg8: memref<8x32xf32, #tpu.memory_space<vmem>>) attributes {dimension_semantics = [#tpu.dimension_semantics<parallel>, #tpu.dimension_semantics<arbitrary>], iteration_bounds = array<i64: 1, 1>, scalar_prefetch = 0 : i64, scratch_operands = 1 : i64, tpu.core_type = #tpu.core_type<tc>, window_params = [{transform_indices = @transform_0, window_bounds = array<i64: 8, 32>}, {transform_indices = @transform_1, window_bounds = array<i64: 32, 128>}, {transform_indices = @transform_2, window_bounds = array<i64: 1, 128>}, {transform_indices = @transform_3, window_bounds = array<i64: 128, 32>}, {pipeline_mode = #tpu.pipeline_mode<synchronous>, transform_indices = @transform_4, window_bounds = array<i64: 1, 32>}, {transform_indices = @transform_5, window_bounds = array<i64: 8, 32>}]} {
    %c0_i32 = arith.constant 0 : i32
    %0 = arith.cmpi eq, %arg1, %c0_i32 : i32
    %1 = arith.extui %0 : i1 to i32
    %c0_i32_0 = arith.constant 0 : i32
    %2 = arith.cmpi ne, %1, %c0_i32_0 : i32
    scf.if %2 {
      %cst_19 = arith.constant 0.000000e+00 : f32
      %30 = vector.broadcast %cst_19 : f32 to vector<8x32xf32>
      %c0_20 = arith.constant 0 : index
      %c0_21 = arith.constant 0 : index
      %31 = vector.load %arg8[%c0_20, %c0_21] : memref<8x32xf32, #tpu.memory_space<vmem>>, vector<8x32xf32>
      tpu.vector_store %arg8[%c0_20, %c0_21], %30 {strides = array<i32>} : memref<8x32xf32, #tpu.memory_space<vmem>>, vector<8x32xf32>,
    } else {
    }
    %c0 = arith.constant 0 : index
    %c0_1 = arith.constant 0 : index
    %3 = vector.load %arg2[%c0, %c0_1] : memref<8x32xf32, #tpu.memory_space<vmem>>, vector<8x32xf32>
    %c0_2 = arith.constant 0 : index
    %c0_3 = arith.constant 0 : index
    %4 = vector.load %arg3[%c0_2, %c0_3] : memref<32x128xf32, #tpu.memory_space<vmem>>, vector<32x128xf32>
    %cst = arith.constant dense<0.000000e+00> : vector<8x128xf32>
    %5 = tpu.matmul %3, %4, %cst {dimension_numbers = #tpu.dot_dimension_numbers<[1], [0], [0], [1], [0, 0, 1, 1], [], []>} : vector<8x32xf32>, vector<32x128xf32>, vector<8x128xf32> -> vector<8x128xf32>
    %c0_4 = arith.constant 0 : index
    %c0_5 = arith.constant 0 : index
    %6 = vector.load %arg4[%c0_4, %c0_5] : memref<1x128xf32, #tpu.memory_space<vmem>>, vector<1x128xf32>
    %7 = vector.broadcast %6 : vector<1x128xf32> to vector<8x128xf32>
    %8 = arith.addf %5, %7 : vector<8x128xf32>
    %cst_6 = arith.constant 5.000000e-01 : f32
    %9 = vector.broadcast %cst_6 : f32 to vector<8x128xf32>
    %10 = arith.mulf %9, %8 : vector<8x128xf32>
    %11 = arith.mulf %8, %8 : vector<8x128xf32>
    %12 = arith.mulf %8, %11 : vector<8x128xf32>
    %cst_7 = arith.constant 4.471500e-02 : f32
    %13 = vector.broadcast %cst_7 : f32 to vector<8x128xf32>
    %14 = arith.mulf %13, %12 : vector<8x128xf32>
    %15 = arith.addf %8, %14 : vector<8x128xf32>
    %cst_8 = arith.constant 0.797884583 : f32
    %16 = vector.broadcast %cst_8 : f32 to vector<8x128xf32>
    %17 = arith.mulf %16, %15 : vector<8x128xf32>
    %18 = math.tanh %17 : vector<8x128xf32>
    %cst_9 = arith.constant 1.000000e+00 : f32
    %19 = vector.broadcast %cst_9 : f32 to vector<8x128xf32>
    %20 = arith.addf %19, %18 : vector<8x128xf32>
    %21 = arith.mulf %10, %20 : vector<8x128xf32>
    %c0_10 = arith.constant 0 : index
    %c0_11 = arith.constant 0 : index
    %22 = vector.load %arg8[%c0_10, %c0_11] : memref<8x32xf32, #tpu.memory_space<vmem>>, vector<8x32xf32>
    %c0_12 = arith.constant 0 : index
    %c0_13 = arith.constant 0 : index
    %23 = vector.load %arg5[%c0_12, %c0_13] : memref<128x32xf32, #tpu.memory_space<vmem>>, vector<128x32xf32>
    %cst_14 = arith.constant dense<0.000000e+00> : vector<8x32xf32>
    %24 = tpu.matmul %21, %23, %cst_14 {dimension_numbers = #tpu.dot_dimension_numbers<[1], [0], [0], [1], [0, 0, 1, 1], [], []>} : vector<8x128xf32>, vector<128x32xf32>, vector<8x32xf32> -> vector<8x32xf32>
    %25 = arith.addf %22, %24 : vector<8x32xf32>
    %c0_15 = arith.constant 0 : index
    %c0_16 = arith.constant 0 : index
    %26 = vector.load %arg8[%c0_15, %c0_16] : memref<8x32xf32, #tpu.memory_space<vmem>>, vector<8x32xf32>
    tpu.vector_store %arg8[%c0_15, %c0_16], %25 {strides = array<i32>} : memref<8x32xf32, #tpu.memory_space<vmem>>, vector<8x32xf32>,
    %c0_i32_17 = arith.constant 0 : i32
    %27 = arith.cmpi eq, %arg1, %c0_i32_17 : i32
    %28 = arith.extui %27 : i1 to i32
    %c0_i32_18 = arith.constant 0 : i32
    %29 = arith.cmpi ne, %28, %c0_i32_18 : i32
    scf.if %29 {
      %c0_19 = arith.constant 0 : index
      %c0_20 = arith.constant 0 : index
      %30 = vector.load %arg8[%c0_19, %c0_20] : memref<8x32xf32, #tpu.memory_space<vmem>>, vector<8x32xf32>
      %c0_21 = arith.constant 0 : index
      %c0_22 = arith.constant 0 : index
      %31 = vector.load %arg6[%c0_21, %c0_22] : memref<1x32xf32, #tpu.memory_space<vmem>>, vector<1x32xf32>
      %32 = vector.broadcast %31 : vector<1x32xf32> to vector<8x32xf32>
      %33 = arith.addf %30, %32 : vector<8x32xf32>
      %c0_23 = arith.constant 0 : index
      %c0_24 = arith.constant 0 : index
      %34 = vector.load %arg7[%c0_23, %c0_24] : memref<8x32xf32, #tpu.memory_space<vmem>>, vector<8x32xf32>
      tpu.vector_store %arg7[%c0_23, %c0_24], %33 {strides = array<i32>} : memref<8x32xf32, #tpu.memory_space<vmem>>, vector<8x32xf32>,
    } else {
    }
    return
  }
  func.func @transform_0(%arg0: i32, %arg1: i32) -> (i32, i32) {
    %c0_i32 = arith.constant 0 : i32
    %c0_i32_0 = arith.constant 0 : i32
    return %arg0, %c0_i32 : i32, i32
  }
  func.func @transform_1(%arg0: i32, %arg1: i32) -> (i32, i32) {
    %c0_i32 = arith.constant 0 : i32
    %c0_i32_0 = arith.constant 0 : i32
    return %c0_i32, %arg1 : i32, i32
  }
  func.func @transform_2(%arg0: i32, %arg1: i32) -> (i32, i32) {
    %c0_i32 = arith.constant 0 : i32
    %c0_i32_0 = arith.constant 0 : i32
    return %c0_i32, %arg1 : i32, i32
  }
  func.func @transform_3(%arg0: i32, %arg1: i32) -> (i32, i32) {
    %c0_i32 = arith.constant 0 : i32
    %c0_i32_0 = arith.constant 0 : i32
    return %arg1, %c0_i32 : i32, i32
  }
  func.func @transform_4(%arg0: i32, %arg1: i32) -> (i32, i32) {
    %c0_i32 = arith.constant 0 : i32
    %c0_i32_0 = arith.constant 0 : i32
    %c0_i32_1 = arith.constant 0 : i32
    return %c0_i32, %c0_i32_0 : i32, i32
  }
  func.func @transform_5(%arg0: i32, %arg1: i32) -> (i32, i32) {
    %c0_i32 = arith.constant 0 : i32
    %c0_i32_0 = arith.constant 0 : i32
    return %arg0, %c0_i32 : i32, i32
  }
}

</mosaic_0001>

<llo_original>
// kernel: tpu_custom_call.1
$region0: #{tpu_custom_call.1}
  #allocation0 [shape = 'u32[]', space=smem, size = 0x4, offset = 0x4, fixed_abs, tag = 'smem constant byte address 0x4 - core index']
  #allocation1 [shape = 'u32[144,128]{1,0:T(1,128)}', space=vmem, size = 0x12000, scoped, tag = 'internal scratch']
  #allocation2 [shape = 'f32[8,32]{1,0:T(8,128)}', space=vmem, size = 0x1000, scoped, tag = 'scratch operand']
  %s0 = inlined_call_operand.vmem [shape: f32[8,32], index: 0, kind: input, shape index: {}]
  %s1 = inlined_call_operand.vmem [shape: f32[32,128], index: 1, kind: input, shape index: {}]
  %s2 = inlined_call_operand.vmem [shape: f32[1,128], index: 2, kind: input, shape index: {}]
  %s3 = inlined_call_operand.vmem [shape: f32[128,32], index: 3, kind: input, shape index: {}]
  %s4 = inlined_call_operand.vmem [shape: f32[1,32], index: 4, kind: input, shape index: {}]
  %s5 = inlined_call_operand.hbm [shape: f32[8,32], index: 5, kind: output, shape index: {}]
  %s6 = sld [smem:[#allocation0]]
  $region38: #{tpu_custom_call.1} parent=0
    _
  %s8 = ssub.s32 1, %s6
  %s9 = scalar_select 0, %s8, %s6
  $region1: #{tpu_custom_call.1} parent=0
    #allocation3 [shape = 'u8[4096]{0}', space=vmem, size = 0x1000, scoped, tag = 'output window, operand 0, single buffered']
    #allocation4 [shape = 's32[1]{0}', space=sflag, size = 0x4, scoped, tag = 'scoped memory for tpu_custom_call.1']
    %10 = vsyncpa [#allocation4], 0
    // Predicated region
    $region2: #{tpu_custom_call.1} parent=1 // pred_check
      _
    $region3: #{tpu_custom_call.1} parent=1 // pred_check_branch
      %12 = sbr.rel (0) target = $region5
    $region4: #{tpu_custom_call.1} parent=1 // pred_region
      _
    $region5: #{tpu_custom_call.1} parent=1 // pred_fallthru
      _
    // Predicated region
    $region6: #{tpu_custom_call.1} parent=1 // pred_check
      _
    $region7: #{tpu_custom_call.1} parent=1 // pred_check_branch
      %14 = sbr.rel (0) target = $region9
    $region8: #{tpu_custom_call.1} parent=1 // pred_region
      _
    $region9: #{tpu_custom_call.1} parent=1 // pred_fallthru
      _
    // Predicated region
    $region10: #{tpu_custom_call.1} parent=1 // pred_check
      _
    $region11: #{tpu_custom_call.1} parent=1 // pred_check_branch
      %16 = sbr.rel (0) target = $region13
    $region12: #{tpu_custom_call.1} parent=1 // pred_region
      _
    $region13: #{tpu_custom_call.1} parent=1 // pred_fallthru
      _
    // Predicated region
    $region14: #{tpu_custom_call.1} parent=1 // pred_check
      _
    $region15: #{tpu_custom_call.1} parent=1 // pred_check_branch
      %18 = sbr.rel (0) target = $region17
    $region16: #{tpu_custom_call.1} parent=1 // pred_region
      _
    $region17: #{tpu_custom_call.1} parent=1 // pred_fallthru
      _
    // Predicated region
    $region18: #{tpu_custom_call.1} parent=1 // pred_check
      _
    $region19: #{tpu_custom_call.1} parent=1 // pred_check_branch
      %20 = sbr.rel (0) target = $region21
    $region20: #{tpu_custom_call.1} parent=1 // pred_region
      _
    $region21: #{tpu_custom_call.1} parent=1 // pred_fallthru
      _
    %p21 = scmp.eq.s32.totalorder 0, 0
    // Predicated region
    $region22: #{tpu_custom_call.1} parent=1 // pred_check
      %p22 = pneg %p21
    $region23: #{tpu_custom_call.1} parent=1 // pred_check_branch
      %24 = sbr.rel (%p22) target = $region25
    $region24: #{tpu_custom_call.1} parent=1 // pred_region
      %vm25 = vcmask 261120
      %26 = vst.msk [vmem:[#allocation2] sm:$0xff] %vm25, 0.0
    $region25: #{tpu_custom_call.1} parent=1 // pred_fallthru
      _
    %v27 = vld [vmem:[%s0] sm:$0xff]
    %v28 = vld [vmem:[%s1] sm:$0xff]
    %v29 = vld [vmem:[%s1 + $0x8] sm:$0xff]
    %v30 = vld [vmem:[%s1 + $0x10] sm:$0xff]
    %v31 = vld [vmem:[%s1 + $0x18] sm:$0xff]
    %v32 = vld [vmem:[%s2] sm:$0x1]
    %v34 = vlaneseq
    %v35 = vshrl.u32 %v34, 7
    %v36 = vsub.s32 0, %v35
    %v37 = vrot.slane %v32, %v36
    %vm39 = vcmask 261120
    %v41 = vsel %vm39, %v27, 0
    %43 = vmatprep.subr.mxu0 0.0
    %44 = vmatpush1.msra.mxu0 0.0
    %45 = vmatprep.subr.mxu0 0.0
    %46 = vmatpush1.msra.mxu0 0.0
    %47 = vmatprep.subr.mxu0 0.0
    %48 = vmatpush1.msra.mxu0 0.0
    %49 = vmatprep.subr.mxu0 0.0
    %50 = vmatpush1.msra.mxu0 0.0
    %51 = vmatprep.subr.mxu0 0.0
    %52 = vmatpush1.msra.mxu0 0.0
    %53 = vmatprep.subr.mxu0 0.0
    %54 = vmatpush1.msra.mxu0 0.0
    %55 = vmatprep.subr.mxu0 0.0
    %56 = vmatpush1.msra.mxu0 0.0
    %57 = vmatprep.subr.mxu0 0.0
    %58 = vmatpush1.msra.mxu0 0.0
    %59 = vmatprep.subr.mxu0 0.0
    %60 = vmatpush1.msra.mxu0 0.0
    %61 = vmatprep.subr.mxu0 0.0
    %62 = vmatpush1.msra.mxu0 0.0
    %63 = vmatprep.subr.mxu0 0.0
    %64 = vmatpush1.msra.mxu0 0.0
    %65 = vmatprep.subr.mxu0 0.0
    %66 = vmatpush1.msra.mxu0 0.0
    %67 = vmatprep.subr.mxu0 0.0
    %68 = vmatpush1.msra.mxu0 %v31
    %69 = vmatprep.subr.mxu0 0.0
    %70 = vmatpush1.msra.mxu0 %v30
    %71 = vmatprep.subr.mxu0 0.0
    %72 = vmatpush1.msra.mxu0 %v29
    %73 = vmatprep.subr.mxu0 0.0
    %74 = vmatpush1.msra.mxu0 %v28
    %75 = vmatprep.subr.mxu0 0.0
    %76 = vmatpush2.msra.mxu0 0.0
    %77 = vmatprep.subr.mxu0 0.0
    %78 = vmatpush2.msra.mxu0 0.0
    %79 = vmatprep.subr.mxu0 0.0
    %80 = vmatpush2.msra.mxu0 0.0
    %81 = vmatprep.subr.mxu0 0.0
    %82 = vmatpush2.msra.mxu0 0.0
    %83 = vmatprep.subr.mxu0 0.0
    %84 = vmatpush2.msra.mxu0 0.0
    %85 = vmatprep.subr.mxu0 0.0
    %86 = vmatpush2.msra.mxu0 0.0
    %87 = vmatprep.subr.mxu0 0.0
    %88 = vmatpush2.msra.mxu0 0.0
    %89 = vmatprep.subr.mxu0 0.0
    %90 = vmatpush2.msra.mxu0 0.0
    %91 = vmatprep.subr.mxu0 0.0
    %92 = vmatpush2.msra.mxu0 0.0
    %93 = vmatprep.subr.mxu0 0.0
    %94 = vmatpush2.msra.mxu0 0.0
    %95 = vmatprep.subr.mxu0 0.0
    %96 = vmatpush2.msra.mxu0 0.0
    %97 = vmatprep.subr.mxu0 0.0
    %98 = vmatpush2.msra.mxu0 0.0
    %99 = vmatprep.subr.mxu0 0.0
    %100 = vmatpush2.msra.mxu0 0.0
    %101 = vmatprep.subr.mxu0 0.0
    %102 = vmatpush2.msra.mxu0 0.0
    %103 = vmatprep.subr.mxu0 0.0
    %104 = vmatpush2.msra.mxu0 0.0
    %105 = vmatprep.subr.mxu0 0.0
    %106 = vmatpush2.msra.mxu0 0.0
    %107 = vmatprep.mubr.f32.mxu0 0.0
    %108 = vmatmul.mubr.f32.gmra.mxu0 %v41
    %v109 = vpop.f32.mrf.mxu0
    %v110 = vadd.f32 %v37, %v109
    %v111 = vpop.f32.mrf.mxu0
    %112 = vdwg.mxu0
    %v113 = vmul.f32 %v110, 0.5
    %v114 = vmul.f32 %v110, %v110
    %v115 = vmul.f32 %v110, %v114
    %v116 = vmul.f32 %v115, 0.044715
    %v117 = vadd.f32 %v110, %v116
    %v118 = vmul.f32 %v117, 0.7978846
    %v119 = vtanh.pop %v118
    %v120 = vadd.f32 %v119, 1.0
    %v121 = vmul.f32 %v113, %v120
    %v122 = vld [vmem:[#allocation2] sm:$0xff]
    %v123 = vld [vmem:[%s3] sm:$0xff]
    %v124 = vld [vmem:[%s3 + $0x8] sm:$0xff]
    %v125 = vld [vmem:[%s3 + $0x10] sm:$0xff]
    %v126 = vld [vmem:[%s3 + $0x18] sm:$0xff]
    %v127 = vld [vmem:[%s3 + $0x20] sm:$0xff]
    %v128 = vld [vmem:[%s3 + $0x28] sm:$0xff]
    %v129 = vld [vmem:[%s3 + $0x30] sm:$0xff]
    %v130 = vld [vmem:[%s3 + $0x38] sm:$0xff]
    %v131 = vld [vmem:[%s3 + $0x40] sm:$0xff]
    %v132 = vld [vmem:[%s3 + $0x48] sm:$0xff]
    %v133 = vld [vmem:[%s3 + $0x50] sm:$0xff]
    %v134 = vld [vmem:[%s3 + $0x58] sm:$0xff]
    %v135 = vld [vmem:[%s3 + $0x60] sm:$0xff]
    %v136 = vld [vmem:[%s3 + $0x68] sm:$0xff]
    %v137 = vld [vmem:[%s3 + $0x70] sm:$0xff]
    %v138 = vld [vmem:[%s3 + $0x78] sm:$0xff]
    %139 = vmatprep.subr.mxu0 0.0
    %140 = vmatpush1.msra.mxu0 %v138
    %141 = vmatprep.subr.mxu0 0.0
    %142 = vmatpush1.msra.mxu0 %v137
    %143 = vmatprep.subr.mxu0 0.0
    %144 = vmatpush1.msra.mxu0 %v136
    %145 = vmatprep.subr.mxu0 0.0
    %146 = vmatpush1.msra.mxu0 %v135
    %147 = vmatprep.subr.mxu0 0.0
    %148 = vmatpush1.msra.mxu0 %v134
    %149 = vmatprep.subr.mxu0 0.0
    %150 = vmatpush1.msra.mxu0 %v133
    %151 = vmatprep.subr.mxu0 0.0
    %152 = vmatpush1.msra.mxu0 %v132
    %153 = vmatprep.subr.mxu0 0.0
    %154 = vmatpush1.msra.mxu0 %v131
    %155 = vmatprep.subr.mxu0 0.0
    %156 = vmatpush1.msra.mxu0 %v130
    %157 = vmatprep.subr.mxu0 0.0
    %158 = vmatpush1.msra.mxu0 %v129
    %159 = vmatprep.subr.mxu0 0.0
    %160 = vmatpush1.msra.mxu0 %v128
    %161 = vmatprep.subr.mxu0 0.0
    %162 = vmatpush1.msra.mxu0 %v127
    %163 = vmatprep.subr.mxu0 0.0
    %164 = vmatpush1.msra.mxu0 %v126
    %165 = vmatprep.subr.mxu0 0.0
    %166 = vmatpush1.msra.mxu0 %v125
    %167 = vmatprep.subr.mxu0 0.0
    %168 = vmatpush1.msra.mxu0 %v124
    %169 = vmatprep.subr.mxu0 0.0
    %170 = vmatpush1.msra.mxu0 %v123
    %171 = vmatprep.subr.mxu0 0.0
    %172 = vmatpush2.msra.mxu0 0.0
    %173 = vmatprep.subr.mxu0 0.0
    %174 = vmatpush2.msra.mxu0 0.0
    %175 = vmatprep.subr.mxu0 0.0
    %176 = vmatpush2.msra.mxu0 0.0
    %177 = vmatprep.subr.mxu0 0.0
    %178 = vmatpush2.msra.mxu0 0.0
    %179 = vmatprep.subr.mxu0 0.0
    %180 = vmatpush2.msra.mxu0 0.0
    %181 = vmatprep.subr.mxu0 0.0
    %182 = vmatpush2.msra.mxu0 0.0
    %183 = vmatprep.subr.mxu0 0.0
    %184 = vmatpush2.msra.mxu0 0.0
    %185 = vmatprep.subr.mxu0 0.0
    %186 = vmatpush2.msra.mxu0 0.0
    %187 = vmatprep.subr.mxu0 0.0
    %188 = vmatpush2.msra.mxu0 0.0
    %189 = vmatprep.subr.mxu0 0.0
    %190 = vmatpush2.msra.mxu0 0.0
    %191 = vmatprep.subr.mxu0 0.0
    %192 = vmatpush2.msra.mxu0 0.0
    %193 = vmatprep.subr.mxu0 0.0
    %194 = vmatpush2.msra.mxu0 0.0
    %195 = vmatprep.subr.mxu0 0.0
    %196 = vmatpush2.msra.mxu0 0.0
    %197 = vmatprep.subr.mxu0 0.0
    %198 = vmatpush2.msra.mxu0 0.0
    %199 = vmatprep.subr.mxu0 0.0
    %200 = vmatpush2.msra.mxu0 0.0
    %201 = vmatprep.subr.mxu0 0.0
    %202 = vmatpush2.msra.mxu0 0.0
    %203 = vmatprep.mubr.f32.mxu0 0.0
    %204 = vmatmul.mubr.f32.gmra.mxu0 %v121
    %v205 = vpop.f32.mrf.mxu0
    %v206 = vadd.f32 0.0, %v205
    %v207 = vpop.f32.mrf.mxu0
    %208 = vdwg.mxu0
    %v209 = vadd.f32 %v122, %v206
    %210 = vst.msk [vmem:[#allocation2] sm:$0xff] %vm39, %v209
    // Predicated region
    $region26: #{tpu_custom_call.1} parent=1 // pred_check
      %p211 = pneg %p21
    $region27: #{tpu_custom_call.1} parent=1 // pred_check_branch
      %213 = sbr.rel (%p211) target = $region29
    $region28: #{tpu_custom_call.1} parent=1 // pred_region
      %v214 = vld [vmem:[#allocation2] sm:$0xff]
      %v215 = vld [vmem:[%s4] sm:$0x1]
      %v217 = vlaneseq
      %v218 = vshrl.u32 %v217, 7
      %v219 = vsub.s32 0, %v218
      %v220 = vrot.slane %v215, %v219
      %v222 = vadd.f32 %v214, %v220
      %223 = vst.msk [vmem:[#allocation3] sm:$0xff] %vm39, %v222
    $region29: #{tpu_custom_call.1} parent=1 // pred_fallthru
      _
    // Predicated region
    $region30: #{tpu_custom_call.1} parent=1 // pred_check
      _
    $region31: #{tpu_custom_call.1} parent=1 // pred_check_branch
      %225 = sbr.rel (0) target = $region33
    $region32: #{tpu_custom_call.1} parent=1 // pred_region
      %s227 = ssub.s32 128, 128
      %228 = vsyncadd [#allocation4], %s227
      %s230 = sshll.u32 [#allocation3], 4
      %s231 = int_to_ptr.vmem [resolvable:$true] %s230
      %233 = dma.vmem_to_hbm [thread:$0]  %s231, 128, %s5, [#allocation4]
    $region33: #{tpu_custom_call.1} parent=1 // pred_fallthru
      _
    // Predicated region
    $region34: #{tpu_custom_call.1} parent=1 // pred_check
      _
    $region35: #{tpu_custom_call.1} parent=1 // pred_check_branch
      %235 = sbr.rel (0) target = $region37
    $region36: #{tpu_custom_call.1} parent=1 // pred_region
      %236 = dma.done [#allocation4], 128
    $region37: #{tpu_custom_call.1} parent=1 // pred_fallthru
      _
    %237 = vsyncpa [#allocation4], 1

</llo_original>
